<compile_context>
chip_gen: v7x
topology: tpu7x:2x2x1
jax: 0.10.0
libtpu: 0.0.40
codegen_flags: <defaults>
</compile_context>

<pallas_src>
import functools

import jax
import jax.numpy as jnp
from jax import lax
from jax.experimental import pallas as pl
from jax.experimental.pallas import tpu as pltpu


def _round_up(a: int, b: int) -> int:
    return ((a + b - 1) // b) * b


def _label_smooth_loss_kernel(x_ref, t_ref, o_ref, *, smoothing: float, c_actual: int):
    """Writes per-row smoothed loss: loss_row = logsumexp(x) - sum(weight * x)."""
    x = x_ref[...].astype(jnp.float32)            # (TILE_N, C_PAD) -> f32 math
    t = t_ref[...]                                # (TILE_N, 1) int32 targets
    tn, cp = x.shape

    col = lax.broadcasted_iota(jnp.int32, (tn, cp), 1)
    valid = col < c_actual                        # mask lane padding

    # Numerically-stable logsumexp over valid classes.
    xm = jnp.where(valid, x, jnp.float32(-1e30))
    m = jnp.max(xm, axis=-1, keepdims=True)
    lse = m + jnp.log(jnp.sum(jnp.exp(xm - m), axis=-1, keepdims=True))

    # Degenerate C == 1 guarded (PyTorch would divide by zero).
    base = (smoothing / (c_actual - 1.0)) if c_actual > 1 else 0.0
    hot = 1.0 - smoothing

    xz = jnp.where(valid, x, jnp.float32(0.0))
    sum_x = jnp.sum(xz, axis=-1, keepdims=True)
    x_t = jnp.sum(jnp.where(col == t, xz, jnp.float32(0.0)), axis=-1, keepdims=True)
    wx = jnp.float32(base) * sum_x + jnp.float32(hot - base) * x_t

    o_ref[...] = lse - wx                         # (TILE_N, 1) per-row loss


def label_smooth_loss(logits: jax.Array, target: jax.Array,
                      smoothing: float = 0.0, tile_n: int | None = None) -> jax.Array:
    """logits: (N, C) float (f32 or bf16), target: (N,) int. Returns scalar f32 loss."""
    n, c = logits.shape
    itemsize = jnp.dtype(logits.dtype).itemsize

    # Lane-dense class axis.
    c_pad = _round_up(c, 128)

    # Row tile: largest dtype-aligned multiple that keeps a double-buffered
    # logits tile well inside every generation's scoped-VMEM budget
    # (v5e 16 MiB default scoped, v7x 64 MiB physical).
    align = max(8, 32 // itemsize)                # f32 -> 8, bf16 -> 16 sublanes
    if tile_n is None:
        per_buf_budget = 6 * 1024 * 1024
        t = per_buf_budget // (c_pad * itemsize)
        t = max(align, min(512, (t // align) * align))
        tile_n = min(t, _round_up(max(n, 1), align))
    n_pad = _round_up(n, tile_n)
    num_tiles = n_pad // tile_n

    # TODO(synk): for very large vocab (C >= ~64k) add an inner 'arbitrary' grid
    # axis over class chunks with a running logsumexp instead of one wide tile.

    x = logits
    if c_pad != c or n_pad != n:
        x = jnp.pad(x, ((0, n_pad - n), (0, c_pad - c)))
    t2 = target.astype(jnp.int32).reshape(n, 1)
    if n_pad != n:
        t2 = jnp.pad(t2, ((0, n_pad - n), (0, 0)))

    kernel = functools.partial(
        _label_smooth_loss_kernel, smoothing=float(smoothing), c_actual=int(c))

    tile_in_bytes = tile_n * c_pad * itemsize
    vmem_limit = int(min(48 * 2**20,
                         max(16 * 2**20,
                             2 * tile_in_bytes + 2 * tile_n * c_pad * 4 + (1 << 20))))

    cost = pl.CostEstimate(
        flops=8 * n_pad * c_pad,
        transcendentals=n_pad * (c_pad + 1),
        bytes_accessed=n_pad * c_pad * itemsize + 2 * n_pad * 4,
    )

    per_row = pl.pallas_call(
        kernel,
        out_shape=jax.ShapeDtypeStruct((n_pad, 1), jnp.float32),
        grid_spec=pltpu.PrefetchScalarGridSpec(
            num_scalar_prefetch=0,
            grid=(num_tiles,),
            in_specs=[
                pl.BlockSpec((tile_n, c_pad), lambda i: (i, 0)),
                pl.BlockSpec((tile_n, 1), lambda i: (i, 0)),
            ],
            out_specs=pl.BlockSpec((tile_n, 1), lambda i: (i, 0)),
        ),
        compiler_params=pltpu.CompilerParams(
            dimension_semantics=("parallel",),
            vmem_limit_bytes=vmem_limit,
        ),
        cost_estimate=cost,
    )(x, t2)

    # Tiny final reduction in plain XLA; padded rows sliced off.
    return jnp.sum(per_row[:n, 0]) / jnp.float32(n)


def _reference(logits, target, smoothing):
    logits = logits.astype(jnp.float32)
    log_prob = jax.nn.log_softmax(logits, axis=-1)
    n, c = logits.shape
    weight = jnp.full((n, c), smoothing / (c - 1.0), dtype=jnp.float32)
    weight = weight.at[jnp.arange(n), target].set(1.0 - smoothing)
    return jnp.mean(jnp.sum(-weight * log_prob, axis=-1))


if __name__ == "__main__":
    key = jax.random.PRNGKey(0)
    k1, k2 = jax.random.split(key)

    N, C = 8, 32
    smoothing = 0.1

    logits = jax.random.normal(k1, (N, C), dtype=jnp.float32)
    target = jax.random.randint(k2, (N,), 0, C, dtype=jnp.int32)

    loss = jax.block_until_ready(label_smooth_loss(logits, target, smoothing=smoothing))
    ref = _reference(logits, target, smoothing)
    assert jnp.isfinite(loss), "loss is not finite"
    assert jnp.allclose(loss, ref, rtol=1e-5, atol=1e-5), (loss, ref)

    # bf16-over-HBM path (memory-bound workload; math stays f32 in-kernel).
    logits_bf16 = logits.astype(jnp.bfloat16)
    loss_bf16 = jax.block_until_ready(
        label_smooth_loss(logits_bf16, target, smoothing=smoothing))
    ref_bf16 = _reference(logits_bf16, target, smoothing)
    assert jnp.isfinite(loss_bf16), "bf16 loss is not finite"
    assert jnp.allclose(loss_bf16, ref_bf16, rtol=1e-3, atol=1e-3), (loss_bf16, ref_bf16)

    print("KERNEL_OK")
</pallas_src>

<mosaic_0001>
module attributes {stable_mosaic.version = 11 : i64} {
  func.func @_label_smooth_loss_kernel(%arg0: i32, %arg1: memref<8x128xf32, #tpu.memory_space<vmem>>, %arg2: memref<8x1xi32, #tpu.memory_space<vmem>>, %arg3: memref<8x1xf32, #tpu.memory_space<vmem>>) attributes {dimension_semantics = [#tpu.dimension_semantics<parallel>], iteration_bounds = array<i64: 1>, scalar_prefetch = 0 : i64, scratch_operands = 0 : i64, tpu.core_type = #tpu.core_type<tc>, window_params = [{transform_indices = @transform_0, window_bounds = array<i64: 8, 128>}, {transform_indices = @transform_1, window_bounds = array<i64: 8, 1>}, {transform_indices = @transform_2, window_bounds = array<i64: 8, 1>}]} {
    %c0 = arith.constant 0 : index
    %c0_0 = arith.constant 0 : index
    %0 = vector.load %arg1[%c0, %c0_0] : memref<8x128xf32, #tpu.memory_space<vmem>>, vector<8x128xf32>
    %c0_1 = arith.constant 0 : index
    %c0_2 = arith.constant 0 : index
    %1 = vector.load %arg2[%c0_1, %c0_2] : memref<8x1xi32, #tpu.memory_space<vmem>>, vector<8x1xi32>
    %2 = tpu.iota {dimensions = array<i32: 1>} : vector<8x128xi32>
    %c32_i32 = arith.constant 32 : i32
    %3 = vector.broadcast %c32_i32 : i32 to vector<8x128xi32>
    %4 = arith.cmpi slt, %2, %3 : vector<8x128xi32>
    %cst = arith.constant -1.000000e+30 : f32
    %5 = vector.broadcast %cst : f32 to vector<8x128xf32>
    %6 = arith.select %4, %0, %5 : vector<8x128xi1>, vector<8x128xf32>
    %cst_3 = arith.constant dense<0xFF800000> : vector<8xf32>
    %7 = vector.multi_reduction <maximumf>, %6, %cst_3 [1] : vector<8x128xf32> to vector<8xf32>
    %8 = vector.shape_cast %7 : vector<8xf32> to vector<8x1xf32>
    %9 = vector.broadcast %8 : vector<8x1xf32> to vector<8x128xf32>
    %10 = arith.subf %6, %9 : vector<8x128xf32>
    %11 = math.exp %10 : vector<8x128xf32>
    %cst_4 = arith.constant dense<0.000000e+00> : vector<8xf32>
    %12 = vector.multi_reduction <add>, %11, %cst_4 [1] : vector<8x128xf32> to vector<8xf32>
    %13 = vector.shape_cast %12 : vector<8xf32> to vector<8x1xf32>
    %14 = math.log %13 : vector<8x1xf32>
    %15 = arith.addf %8, %14 : vector<8x1xf32>
    %cst_5 = arith.constant 0.000000e+00 : f32
    %16 = vector.broadcast %cst_5 : f32 to vector<8x128xf32>
    %17 = arith.select %4, %0, %16 : vector<8x128xi1>, vector<8x128xf32>
    %cst_6 = arith.constant dense<0.000000e+00> : vector<8xf32>
    %18 = vector.multi_reduction <add>, %17, %cst_6 [1] : vector<8x128xf32> to vector<8xf32>
    %19 = vector.shape_cast %18 : vector<8xf32> to vector<8x1xf32>
    %20 = vector.broadcast %1 : vector<8x1xi32> to vector<8x128xi32>
    %21 = arith.cmpi eq, %2, %20 : vector<8x128xi32>
    %cst_7 = arith.constant 0.000000e+00 : f32
    %22 = vector.broadcast %cst_7 : f32 to vector<8x128xf32>
    %23 = arith.select %21, %17, %22 : vector<8x128xi1>, vector<8x128xf32>
    %cst_8 = arith.constant dense<0.000000e+00> : vector<8xf32>
    %24 = vector.multi_reduction <add>, %23, %cst_8 [1] : vector<8x128xf32> to vector<8xf32>
    %25 = vector.shape_cast %24 : vector<8xf32> to vector<8x1xf32>
    %cst_9 = arith.constant 0.0032258064 : f32
    %26 = vector.broadcast %cst_9 : f32 to vector<8x1xf32>
    %27 = arith.mulf %26, %19 : vector<8x1xf32>
    %cst_10 = arith.constant 0.896774172 : f32
    %28 = vector.broadcast %cst_10 : f32 to vector<8x1xf32>
    %29 = arith.mulf %28, %25 : vector<8x1xf32>
    %30 = arith.addf %27, %29 : vector<8x1xf32>
    %31 = arith.subf %15, %30 : vector<8x1xf32>
    %c0_11 = arith.constant 0 : index
    %c0_12 = arith.constant 0 : index
    %32 = vector.load %arg3[%c0_11, %c0_12] : memref<8x1xf32, #tpu.memory_space<vmem>>, vector<8x1xf32>
    tpu.vector_store %arg3[%c0_11, %c0_12], %31 {strides = array<i32>} : memref<8x1xf32, #tpu.memory_space<vmem>>, vector<8x1xf32>,
    return
  }
  func.func @transform_0(%arg0: i32) -> (i32, i32) {
    %c0_i32 = arith.constant 0 : i32
    %c0_i32_0 = arith.constant 0 : i32
    return %arg0, %c0_i32 : i32, i32
  }
  func.func @transform_1(%arg0: i32) -> (i32, i32) {
    %c0_i32 = arith.constant 0 : i32
    %c0_i32_0 = arith.constant 0 : i32
    return %arg0, %c0_i32 : i32, i32
  }
  func.func @transform_2(%arg0: i32) -> (i32, i32) {
    %c0_i32 = arith.constant 0 : i32
    %c0_i32_0 = arith.constant 0 : i32
    return %arg0, %c0_i32 : i32, i32
  }
}

</mosaic_0001>

<llo_original>
// kernel: tpu_custom_call.1
$region0: #{tpu_custom_call.1}
  #allocation0 [shape = 'u32[]', space=smem, size = 0x4, offset = 0x4, fixed_abs, tag = 'smem constant byte address 0x4 - core index']
  #allocation1 [shape = 'u32[144,128]{1,0:T(1,128)}', space=vmem, size = 0x12000, scoped, tag = 'internal scratch']
  %s0 = inlined_call_operand.vmem [shape: f32[8,128], index: 0, kind: input, shape index: {}]
  %s1 = inlined_call_operand.vmem [shape: s32[8,1], index: 1, kind: input, shape index: {}]
  %s2 = inlined_call_operand.vmem [shape: f32[8,1], index: 2, kind: output, shape index: {}]
  %s3 = sld [smem:[#allocation0]]
  $region18: #{tpu_custom_call.1} parent=0
    _
  %s5 = ssub.s32 1, %s3
  %s6 = scalar_select 0, %s5, %s3
  // Predicated region
  $region2: #{tpu_custom_call.1} parent=0 // pred_check
    _
  $region3: #{tpu_custom_call.1} parent=0 // pred_check_branch
    %8 = sbr.rel (0) target = $region5
  $region4: #{tpu_custom_call.1} parent=0 // pred_region
    _
  $region5: #{tpu_custom_call.1} parent=0 // pred_fallthru
    _
  // Predicated region
  $region6: #{tpu_custom_call.1} parent=0 // pred_check
    _
  $region7: #{tpu_custom_call.1} parent=0 // pred_check_branch
    %10 = sbr.rel (0) target = $region9
  $region8: #{tpu_custom_call.1} parent=0 // pred_region
    _
  $region9: #{tpu_custom_call.1} parent=0 // pred_fallthru
    _
  %v11 = vld [vmem:[%s0] sm:$0xff]
  %v12 = vld [vmem:[%s1] sm:$0xff]
  %v13 = vlaneseq
  %v14 = vand.u32 %v13, 127
  %vm15 = vcmp.lt.s32.totalorder %v14, 32
  %v16 = vsel %vm15, %v11, -1e+30
  %17 = vmax.xlane.f32.xlu0 %v16
  %v18 = vpop.xlane.xlu0 %17
  %v19 = vsub.f32 %v16, %v18
  %v20 = vmul.f32 %v19, 1.442695
  %v21 = vpow.pop %v20
  %22 = vadd.xlane.f32.xlu0 %v21
  %v23 = vpop.xlane.xlu0 %22
  %v24 = vlog2.pop %v23
  %v25 = vmul.f32 %v24, 0.6931472
  %v26 = vadd.f32 %v18, %v25
  %v27 = vsel %vm15, %v11, 0.0
  %28 = vadd.xlane.f32.xlu0 %v27
  %v29 = vpop.xlane.xlu0 %28
  %30 = vset.pattern.permute.xlu0 0
  %31 = vperm.xlu0 %30, %v12
  %v32 = vpop.permute.xlu0 %31
  %vm33 = vcmp.eq.s32.totalorder %v14, %v32
  %v34 = vsel %vm33, %v27, 0.0
  %35 = vadd.xlane.f32.xlu0 %v34
  %v36 = vpop.xlane.xlu0 %35
  %v37 = vmul.f32 %v29, 0.0032258064
  %v38 = vmul.f32 %v36, 0.8967742
  %v39 = vadd.f32 %v37, %v38
  %v40 = vsub.f32 %v26, %v39
  %vm41 = vcmask 7168
  %42 = vst.msk [vmem:[%s2] sm:$0xff] %vm41, %v40
  // Predicated region
  $region10: #{tpu_custom_call.1} parent=0 // pred_check
    _
  $region11: #{tpu_custom_call.1} parent=0 // pred_check_branch
    %44 = sbr.rel (0) target = $region13
  $region12: #{tpu_custom_call.1} parent=0 // pred_region
    _
  $region13: #{tpu_custom_call.1} parent=0 // pred_fallthru
    _
  // Predicated region
  $region14: #{tpu_custom_call.1} parent=0 // pred_check
    _
  $region15: #{tpu_custom_call.1} parent=0 // pred_check_branch
    %46 = sbr.rel (0) target = $region17
  $region16: #{tpu_custom_call.1} parent=0 // pred_region
    _
  $region17: #{tpu_custom_call.1} parent=0 // pred_fallthru
    _

</llo_original>
